<compile_context>
chip_gen: v5e
topology: v5e:2x2
jax: 0.10.0
libtpu: 0.0.40
codegen_flags: <defaults>
</compile_context>

<pallas_src>
import jax
import jax.numpy as jnp
from jax.experimental import pallas as pl
from jax.experimental.pallas import tpu as pltpu

NUM_MOVIES = 1683
NUM_USERS = 943
EMBEDDING_SIZE = 16
NUM_GENRES = 8
HIDDEN_DIM = 32
FC2_DIM = 64


def _round_up(x, m):
    return ((x + m - 1) // m) * m


def mlp_kernel(x_ref, w1t_ref, b1_ref, w2t_ref, b2_ref, w3c_ref, b3_ref, o_ref):
    # Feature-major layout: x_ref is (D_in, tile); batch lives on lanes, so all
    # loads/stores are lane-dense.
    x = x_ref[...]                                                     # (D_in, tile)

    # fc1 + relu: MXU matmul (bf16/f32 operands), f32 accumulation/bias/ReLU.
    h1 = jnp.dot(w1t_ref[...], x, preferred_element_type=jnp.float32)  # (H1, tile)
    h1 = jnp.maximum(h1 + b1_ref[...], 0.0)

    # fc2 + relu.
    h2 = jnp.dot(w2t_ref[...], h1.astype(w2t_ref.dtype),
                 preferred_element_type=jnp.float32)                   # (H2, tile)
    h2 = jnp.maximum(h2 + b2_ref[...], 0.0)

    # fc3 (out_features == 1): VPU multiply + sublane reduction; the result is a
    # lane-dense (1, tile) row -- no single-lane masked column store.
    out = jnp.sum(h2 * w3c_ref[...], axis=0, keepdims=True) + b3_ref[...]
    o_ref[...] = out.astype(o_ref.dtype)


def movielens_mlp(x, w1, b1, w2, b2, w3, b3, *, batch_tile=8192):
    """x: (B, 2E+G) concatenated features; weights stored (in, out); biases (1, out)."""
    B, d_in = x.shape
    h1_dim = w1.shape[1]
    h2_dim = w2.shape[1]

    # Large batch tiles (multiple of 128 so the batch fills lanes). Per-grid-step
    # overhead is the binding cost for this tiny model, so stream as many rows per
    # step as requested; split evenly to minimize tail padding.
    batch_tile = max(128, _round_up(batch_tile, 128))
    n_steps = max(1, -(-B // batch_tile))            # cdiv
    tile = _round_up(-(-B // n_steps), 128)
    B_pad = tile * n_steps

    if B_pad != B:
        x = jnp.pad(x, ((0, B_pad - B), (0, 0)))
    x_t = x.T                                        # (d_in, B_pad): feature-major

    # Transposed weights / column biases (broadcast over lanes in-kernel).
    w1t = w1.T                                       # (H1, d_in)
    w2t = w2.T                                       # (H2, H1)
    b1c = b1.reshape(h1_dim, 1).astype(jnp.float32)
    b2c = b2.reshape(h2_dim, 1).astype(jnp.float32)
    w3c = w3.reshape(h2_dim, 1).astype(jnp.float32)
    b3c = b3.reshape(1, 1).astype(jnp.float32)

    rep = lambda arr: pl.BlockSpec(arr.shape, lambda i: (0, 0))   # VMEM-resident once

    out = pl.pallas_call(
        mlp_kernel,
        out_shape=jax.ShapeDtypeStruct((1, B_pad), jnp.float32),
        grid=(n_steps,),
        in_specs=[
            pl.BlockSpec((d_in, tile), lambda i: (0, i)),   # batch-tiled feature stream
            rep(w1t), rep(b1c), rep(w2t), rep(b2c), rep(w3c), rep(b3c),
        ],
        # Lane-dense output row: (1, tile) over a (1, B_pad) array; writeback DMA is
        # a contiguous tile*4-byte stripe instead of 4 bytes/row.
        out_specs=pl.BlockSpec((1, tile), lambda i: (0, i)),
        compiler_params=pltpu.CompilerParams(
            dimension_semantics=("parallel",)),
        # NOTE: if the input DMA ever shows up exposed at very large tiles, add
        # pipeline_mode=pl.Buffered(3) to the x BlockSpec (one extra ~1.25 MiB buffer).
    )(x_t, w1t, b1c, w2t, b2c, w3c, b3c)

    return out.reshape(B_pad, 1)[:B]


def movielens_forward(params, movie_id, user_id, genre_id, *,
                      compute_dtype=jnp.float32, batch_tile=8192):
    """genre_id: (B, NUM_GENRES) multi-hot (matches torch genre_id.float())."""
    # TODO(synk): embedding gather kept in XLA (see header) -- fused with the
    # concat + cast + transpose feeding the kernel.
    movie_emb = jnp.take(params["movie_emb"], movie_id, axis=0)   # (B, E)
    user_emb = jnp.take(params["user_emb"], user_id, axis=0)      # (B, E)
    x = jnp.concatenate(
        [movie_emb, user_emb, genre_id.astype(jnp.float32)], axis=1
    ).astype(compute_dtype)                                       # (B, 2E+G)

    cd = compute_dtype   # bf16 is fine on v5e/v6e/v7x: MXU operands only;
                         # bias/ReLU/fc3 stay f32 inside the kernel.
    return movielens_mlp(
        x,
        params["w1"].astype(cd), params["b1"],
        params["w2"].astype(cd), params["b2"],
        params["w3"], params["b3"],
        batch_tile=batch_tile,
    )


def init_params(key):
    ks = jax.random.split(key, 8)
    d_in = 2 * EMBEDDING_SIZE + NUM_GENRES
    s = 0.05
    return {
        "movie_emb": s * jax.random.normal(ks[0], (NUM_MOVIES, EMBEDDING_SIZE), jnp.float32),
        "user_emb": s * jax.random.normal(ks[1], (NUM_USERS, EMBEDDING_SIZE), jnp.float32),
        "w1": s * jax.random.normal(ks[2], (d_in, HIDDEN_DIM), jnp.float32),
        "b1": s * jax.random.normal(ks[3], (1, HIDDEN_DIM), jnp.float32),
        "w2": s * jax.random.normal(ks[4], (HIDDEN_DIM, FC2_DIM), jnp.float32),
        "b2": s * jax.random.normal(ks[5], (1, FC2_DIM), jnp.float32),
        "w3": s * jax.random.normal(ks[6], (FC2_DIM, 1), jnp.float32),
        "b3": s * jax.random.normal(ks[7], (1, 1), jnp.float32),
    }


def reference_forward(params, movie_id, user_id, genre_id):
    movie_emb = params["movie_emb"][movie_id]
    user_emb = params["user_emb"][user_id]
    x = jnp.concatenate([movie_emb, user_emb, genre_id.astype(jnp.float32)], axis=1)
    h1 = jnp.maximum(x @ params["w1"] + params["b1"], 0.0)
    h2 = jnp.maximum(h1 @ params["w2"] + params["b2"], 0.0)
    return h2 @ params["w3"] + params["b3"]


def _make_inputs(key, batch):
    k_m, k_u, k_g = jax.random.split(key, 3)
    movie_id = jax.random.randint(k_m, (batch,), 0, NUM_MOVIES, dtype=jnp.int32)
    user_id = jax.random.randint(k_u, (batch,), 0, NUM_USERS, dtype=jnp.int32)
    genre_id = jax.random.bernoulli(k_g, 0.3, (batch, NUM_GENRES)).astype(jnp.float32)
    return movie_id, user_id, genre_id


if __name__ == "__main__":
    root = jax.random.PRNGKey(0)
    k_params, k_small, k_big = jax.random.split(root, 3)
    params = init_params(k_params)

    # Small deterministic check (B=16 -> one 128-wide padded tile).
    B = 16
    movie_id, user_id, genre_id = _make_inputs(k_small, B)
    out = jax.block_until_ready(movielens_forward(params, movie_id, user_id, genre_id))
    ref = jax.block_until_ready(reference_forward(params, movie_id, user_id, genre_id))
    assert out.shape == (B, 1), out.shape
    assert jnp.allclose(out, ref, atol=1e-4, rtol=1e-4), "f32 mismatch vs reference"

    # Non-multiple-of-128 batch exercises the padded-tail path.
    B2 = 300
    m2, u2, g2 = _make_inputs(k_big, B2)
    out2 = jax.block_until_ready(movielens_forward(params, m2, u2, g2))
    ref2 = jax.block_until_ready(reference_forward(params, m2, u2, g2))
    assert out2.shape == (B2, 1), out2.shape
    assert jnp.allclose(out2, ref2, atol=1e-4, rtol=1e-4), "padded-batch mismatch"

    # bf16 operand path (valid on v5e/v6e/v7x); f32 accumulation keeps this tight.
    out_bf16 = jax.block_until_ready(
        movielens_forward(params, m2, u2, g2, compute_dtype=jnp.bfloat16))
    assert out_bf16.shape == (B2, 1), out_bf16.shape
    assert jnp.allclose(out_bf16, ref2, atol=5e-3, rtol=5e-2), "bf16 mismatch too large"

    print("KERNEL_OK")
</pallas_src>

<mosaic_0001>
module attributes {stable_mosaic.version = 11 : i64} {
  func.func @mlp_kernel(%arg0: i32, %arg1: memref<40x128xf32, #tpu.memory_space<vmem>>, %arg2: memref<32x40xf32, #tpu.memory_space<vmem>>, %arg3: memref<32x1xf32, #tpu.memory_space<vmem>>, %arg4: memref<64x32xf32, #tpu.memory_space<vmem>>, %arg5: memref<64x1xf32, #tpu.memory_space<vmem>>, %arg6: memref<64x1xf32, #tpu.memory_space<vmem>>, %arg7: memref<1x1xf32, #tpu.memory_space<vmem>>, %arg8: memref<1x128xf32, #tpu.memory_space<vmem>>) attributes {dimension_semantics = [#tpu.dimension_semantics<parallel>], iteration_bounds = array<i64: 1>, scalar_prefetch = 0 : i64, scratch_operands = 0 : i64, tpu.core_type = #tpu.core_type<tc>, window_params = [{transform_indices = @transform_0, window_bounds = array<i64: 40, 128>}, {pipeline_mode = #tpu.pipeline_mode<synchronous>, transform_indices = @transform_1, window_bounds = array<i64: 32, 40>}, {pipeline_mode = #tpu.pipeline_mode<synchronous>, transform_indices = @transform_2, window_bounds = array<i64: 32, 1>}, {pipeline_mode = #tpu.pipeline_mode<synchronous>, transform_indices = @transform_3, window_bounds = array<i64: 64, 32>}, {pipeline_mode = #tpu.pipeline_mode<synchronous>, transform_indices = @transform_4, window_bounds = array<i64: 64, 1>}, {pipeline_mode = #tpu.pipeline_mode<synchronous>, transform_indices = @transform_5, window_bounds = array<i64: 64, 1>}, {pipeline_mode = #tpu.pipeline_mode<synchronous>, transform_indices = @transform_6, window_bounds = array<i64: 1, 1>}, {transform_indices = @transform_7, window_bounds = array<i64: 1, 128>}]} {
    %c0 = arith.constant 0 : index
    %c0_0 = arith.constant 0 : index
    %0 = vector.load %arg1[%c0, %c0_0] : memref<40x128xf32, #tpu.memory_space<vmem>>, vector<40x128xf32>
    %c0_1 = arith.constant 0 : index
    %c0_2 = arith.constant 0 : index
    %1 = vector.load %arg2[%c0_1, %c0_2] : memref<32x40xf32, #tpu.memory_space<vmem>>, vector<32x40xf32>
    %cst = arith.constant dense<0.000000e+00> : vector<32x128xf32>
    %2 = tpu.matmul %1, %0, %cst {dimension_numbers = #tpu.dot_dimension_numbers<[1], [0], [0], [1], [0, 0, 1, 1], [], []>} : vector<32x40xf32>, vector<40x128xf32>, vector<32x128xf32> -> vector<32x128xf32>
    %c0_3 = arith.constant 0 : index
    %c0_4 = arith.constant 0 : index
    %3 = vector.load %arg3[%c0_3, %c0_4] : memref<32x1xf32, #tpu.memory_space<vmem>>, vector<32x1xf32>
    %4 = vector.broadcast %3 : vector<32x1xf32> to vector<32x128xf32>
    %5 = arith.addf %2, %4 : vector<32x128xf32>
    %cst_5 = arith.constant 0.000000e+00 : f32
    %6 = vector.broadcast %cst_5 : f32 to vector<32x128xf32>
    %7 = arith.maximumf %5, %6 : vector<32x128xf32>
    %c0_6 = arith.constant 0 : index
    %c0_7 = arith.constant 0 : index
    %8 = vector.load %arg4[%c0_6, %c0_7] : memref<64x32xf32, #tpu.memory_space<vmem>>, vector<64x32xf32>
    %cst_8 = arith.constant dense<0.000000e+00> : vector<64x128xf32>
    %9 = tpu.matmul %8, %7, %cst_8 {dimension_numbers = #tpu.dot_dimension_numbers<[1], [0], [0], [1], [0, 0, 1, 1], [], []>} : vector<64x32xf32>, vector<32x128xf32>, vector<64x128xf32> -> vector<64x128xf32>
    %c0_9 = arith.constant 0 : index
    %c0_10 = arith.constant 0 : index
    %10 = vector.load %arg5[%c0_9, %c0_10] : memref<64x1xf32, #tpu.memory_space<vmem>>, vector<64x1xf32>
    %11 = vector.broadcast %10 : vector<64x1xf32> to vector<64x128xf32>
    %12 = arith.addf %9, %11 : vector<64x128xf32>
    %cst_11 = arith.constant 0.000000e+00 : f32
    %13 = vector.broadcast %cst_11 : f32 to vector<64x128xf32>
    %14 = arith.maximumf %12, %13 : vector<64x128xf32>
    %c0_12 = arith.constant 0 : index
    %c0_13 = arith.constant 0 : index
    %15 = vector.load %arg6[%c0_12, %c0_13] : memref<64x1xf32, #tpu.memory_space<vmem>>, vector<64x1xf32>
    %16 = vector.broadcast %15 : vector<64x1xf32> to vector<64x128xf32>
    %17 = arith.mulf %14, %16 : vector<64x128xf32>
    %cst_14 = arith.constant dense<0.000000e+00> : vector<128xf32>
    %18 = vector.multi_reduction <add>, %17, %cst_14 [0] : vector<64x128xf32> to vector<128xf32>
    %19 = vector.shape_cast %18 : vector<128xf32> to vector<1x128xf32>
    %c0_15 = arith.constant 0 : index
    %c0_16 = arith.constant 0 : index
    %20 = vector.load %arg7[%c0_15, %c0_16] : memref<1x1xf32, #tpu.memory_space<vmem>>, vector<1x1xf32>
    %21 = vector.broadcast %20 : vector<1x1xf32> to vector<1x128xf32>
    %22 = arith.addf %19, %21 : vector<1x128xf32>
    %c0_17 = arith.constant 0 : index
    %c0_18 = arith.constant 0 : index
    %23 = vector.load %arg8[%c0_17, %c0_18] : memref<1x128xf32, #tpu.memory_space<vmem>>, vector<1x128xf32>
    tpu.vector_store %arg8[%c0_17, %c0_18], %22 {strides = array<i32>} : memref<1x128xf32, #tpu.memory_space<vmem>>, vector<1x128xf32>,
    return
  }
  func.func @transform_0(%arg0: i32) -> (i32, i32) {
    %c0_i32 = arith.constant 0 : i32
    %c0_i32_0 = arith.constant 0 : i32
    return %c0_i32, %arg0 : i32, i32
  }
  func.func @transform_1(%arg0: i32) -> (i32, i32) {
    %c0_i32 = arith.constant 0 : i32
    %c0_i32_0 = arith.constant 0 : i32
    %c0_i32_1 = arith.constant 0 : i32
    return %c0_i32, %c0_i32_0 : i32, i32
  }
  func.func @transform_2(%arg0: i32) -> (i32, i32) {
    %c0_i32 = arith.constant 0 : i32
    %c0_i32_0 = arith.constant 0 : i32
    %c0_i32_1 = arith.constant 0 : i32
    return %c0_i32, %c0_i32_0 : i32, i32
  }
  func.func @transform_3(%arg0: i32) -> (i32, i32) {
    %c0_i32 = arith.constant 0 : i32
    %c0_i32_0 = arith.constant 0 : i32
    %c0_i32_1 = arith.constant 0 : i32
    return %c0_i32, %c0_i32_0 : i32, i32
  }
  func.func @transform_4(%arg0: i32) -> (i32, i32) {
    %c0_i32 = arith.constant 0 : i32
    %c0_i32_0 = arith.constant 0 : i32
    %c0_i32_1 = arith.constant 0 : i32
    return %c0_i32, %c0_i32_0 : i32, i32
  }
  func.func @transform_5(%arg0: i32) -> (i32, i32) {
    %c0_i32 = arith.constant 0 : i32
    %c0_i32_0 = arith.constant 0 : i32
    %c0_i32_1 = arith.constant 0 : i32
    return %c0_i32, %c0_i32_0 : i32, i32
  }
  func.func @transform_6(%arg0: i32) -> (i32, i32) {
    %c0_i32 = arith.constant 0 : i32
    %c0_i32_0 = arith.constant 0 : i32
    %c0_i32_1 = arith.constant 0 : i32
    return %c0_i32, %c0_i32_0 : i32, i32
  }
  func.func @transform_7(%arg0: i32) -> (i32, i32) {
    %c0_i32 = arith.constant 0 : i32
    %c0_i32_0 = arith.constant 0 : i32
    return %c0_i32, %arg0 : i32, i32
  }
}

</mosaic_0001>

<llo_original>
// kernel: tpu_custom_call.1
$region0: #{tpu_custom_call.1}
  #allocation0 [shape = 'u32[]', space=smem, size = 0x4, offset = 0x4, fixed_abs, tag = 'smem constant byte address 0x4 - core index']
  #allocation1 [shape = 'u32[72,128]{1,0:T(1,128)}', space=vmem, size = 0x9000, scoped, tag = 'internal scratch']
  #allocation2 [shape = 'f32[1,1]{1,0:T(1,128)S(1)}', space=vmem, size = 0x200, scoped, tag = 'scoped memory for tpu_custom_call.1']
  %s0 = inlined_call_operand.vmem [shape: f32[40,128], index: 0, kind: input, shape index: {}]
  %s1 = inlined_call_operand.vmem [shape: f32[32,40], index: 1, kind: input, shape index: {}]
  %s2 = inlined_call_operand.vmem [shape: f32[32,1], index: 2, kind: input, shape index: {}]
  %s3 = inlined_call_operand.vmem [shape: f32[64,32], index: 3, kind: input, shape index: {}]
  %s4 = inlined_call_operand.vmem [shape: f32[64,1], index: 4, kind: input, shape index: {}]
  %s5 = inlined_call_operand.vmem [shape: f32[64,1], index: 5, kind: input, shape index: {}]
  %s6 = inlined_call_operand.<no memory space> [shape: f32[1,1], index: 6, kind: input, shape index: {}]
  %s7 = inlined_call_operand.hbm [shape: f32[1,128], index: 7, kind: output, shape index: {}]
  %s8 = sld [smem:[#allocation0]]
  $region38: #{tpu_custom_call.1} parent=0
    _
  %s10 = ssub.s32 1, %s8
  %s11 = scalar_select 0, %s10, %s8
  %v12 = vstv %s6
  %13 = vst [vmem:[#allocation2] sm:$0x1] %v12
  $region1: #{tpu_custom_call.1} parent=0
    #allocation3 [shape = 'u8[512]{0}', space=vmem, size = 0x400, scoped, tag = 'output window, operand 0, single buffered']
    #allocation4 [shape = 's32[1]{0}', space=sflag, size = 0x4, scoped, tag = 'scoped memory for tpu_custom_call.1']
    %14 = vsyncpa [#allocation4], 0
    // Predicated region
    $region2: #{tpu_custom_call.1} parent=1 // pred_check
      _
    $region3: #{tpu_custom_call.1} parent=1 // pred_check_branch
      %16 = sbr.rel (0) target = $region5
    $region4: #{tpu_custom_call.1} parent=1 // pred_region
      _
    $region5: #{tpu_custom_call.1} parent=1 // pred_fallthru
      _
    // Predicated region
    $region6: #{tpu_custom_call.1} parent=1 // pred_check
      _
    $region7: #{tpu_custom_call.1} parent=1 // pred_check_branch
      %18 = sbr.rel (0) target = $region9
    $region8: #{tpu_custom_call.1} parent=1 // pred_region
      _
    $region9: #{tpu_custom_call.1} parent=1 // pred_fallthru
      _
    // Predicated region
    $region10: #{tpu_custom_call.1} parent=1 // pred_check
      _
    $region11: #{tpu_custom_call.1} parent=1 // pred_check_branch
      %20 = sbr.rel (0) target = $region13
    $region12: #{tpu_custom_call.1} parent=1 // pred_region
      _
    $region13: #{tpu_custom_call.1} parent=1 // pred_fallthru
      _
    // Predicated region
    $region14: #{tpu_custom_call.1} parent=1 // pred_check
      _
    $region15: #{tpu_custom_call.1} parent=1 // pred_check_branch
      %22 = sbr.rel (0) target = $region17
    $region16: #{tpu_custom_call.1} parent=1 // pred_region
      _
    $region17: #{tpu_custom_call.1} parent=1 // pred_fallthru
      _
    // Predicated region
    $region18: #{tpu_custom_call.1} parent=1 // pred_check
      _
    $region19: #{tpu_custom_call.1} parent=1 // pred_check_branch
      %24 = sbr.rel (0) target = $region21
    $region20: #{tpu_custom_call.1} parent=1 // pred_region
      _
    $region21: #{tpu_custom_call.1} parent=1 // pred_fallthru
      _
    // Predicated region
    $region22: #{tpu_custom_call.1} parent=1 // pred_check
      _
    $region23: #{tpu_custom_call.1} parent=1 // pred_check_branch
      %26 = sbr.rel (0) target = $region25
    $region24: #{tpu_custom_call.1} parent=1 // pred_region
      _
    $region25: #{tpu_custom_call.1} parent=1 // pred_fallthru
      _
    // Predicated region
    $region26: #{tpu_custom_call.1} parent=1 // pred_check
      _
    $region27: #{tpu_custom_call.1} parent=1 // pred_check_branch
      %28 = sbr.rel (0) target = $region29
    $region28: #{tpu_custom_call.1} parent=1 // pred_region
      _
    $region29: #{tpu_custom_call.1} parent=1 // pred_fallthru
      _
    %v29 = vld [vmem:[%s0] sm:$0xff]
    %v30 = vld [vmem:[%s0 + $0x8] sm:$0xff]
    %v31 = vld [vmem:[%s0 + $0x10] sm:$0xff]
    %v32 = vld [vmem:[%s0 + $0x18] sm:$0xff]
    %v33 = vld [vmem:[%s0 + $0x20] sm:$0xff]
    %v34 = vld [vmem:[%s1] sm:$0xff]
    %v35 = vld [vmem:[%s1 + $0x8] sm:$0xff]
    %v36 = vld [vmem:[%s1 + $0x10] sm:$0xff]
    %v37 = vld [vmem:[%s1 + $0x18] sm:$0xff]
    %v38 = vld [vmem:[%s2] sm:$0xff]
    %v39 = vld [vmem:[%s2 + $0x8] sm:$0xff]
    %v40 = vld [vmem:[%s2 + $0x10] sm:$0xff]
    %v41 = vld [vmem:[%s2 + $0x18] sm:$0xff]
    %43 = vset.pattern.permute.xlu0 0
    %44 = vperm.xlu0 %43, %v38
    %v45 = vpop.permute.xlu0 %44
    %48 = vset.pattern.permute.xlu0 0
    %49 = vperm.xlu0 %48, %v39
    %v50 = vpop.permute.xlu0 %49
    %53 = vset.pattern.permute.xlu0 0
    %54 = vperm.xlu0 %53, %v40
    %v55 = vpop.permute.xlu0 %54
    %58 = vset.pattern.permute.xlu0 0
    %59 = vperm.xlu0 %58, %v41
    %v60 = vpop.permute.xlu0 %59
    %vm62 = vcmask 326656
    %v64 = vsel %vm62, %v34, 0
    %v67 = vsel %vm62, %v35, 0
    %v70 = vsel %vm62, %v36, 0
    %v73 = vsel %vm62, %v37, 0
    %75 = vmatpush.msra.mxu0 0.0
    %76 = vmatpush.msra.mxu0 0.0
    %77 = vmatpush.msra.mxu0 0.0
    %78 = vmatpush.msra.mxu0 0.0
    %79 = vmatpush.msra.mxu0 0.0
    %80 = vmatpush.msra.mxu0 0.0
    %81 = vmatpush.msra.mxu0 0.0
    %82 = vmatpush.msra.mxu0 0.0
    %83 = vmatpush.msra.mxu0 0.0
    %84 = vmatpush.msra.mxu0 0.0
    %85 = vmatpush.msra.mxu0 0.0
    %86 = vmatpush.msra.mxu0 %v33
    %87 = vmatpush.msra.mxu0 %v32
    %88 = vmatpush.msra.mxu0 %v31
    %89 = vmatpush.msra.mxu0 %v30
    %90 = vmatpush.msra.mxu0 %v29
    %91 = vmatmul.f32.gmra.mxu0 %v64
    %v92 = vpop.f32.mrf.mxu0
    %v93 = vadd.f32 %v45, %v92
    %94 = vmatmul.f32.gmra.mxu0 %v67
    %v95 = vpop.f32.mrf.mxu0
    %v96 = vadd.f32 %v50, %v95
    %97 = vmatmul.f32.gmra.mxu0 %v70
    %v98 = vpop.f32.mrf.mxu0
    %v99 = vadd.f32 %v55, %v98
    %100 = vmatmul.f32.gmra.mxu0 %v73
    %v101 = vpop.f32.mrf.mxu0
    %v102 = vadd.f32 %v60, %v101
    %103 = vdwg.mxu0
    %v104 = vmax.f32 %v93, 0.0
    %v105 = vmax.f32 %v96, 0.0
    %v106 = vmax.f32 %v99, 0.0
    %v107 = vmax.f32 %v102, 0.0
    %v108 = vld [vmem:[%s3] sm:$0xff]
    %v109 = vld [vmem:[%s3 + $0x8] sm:$0xff]
    %v110 = vld [vmem:[%s3 + $0x10] sm:$0xff]
    %v111 = vld [vmem:[%s3 + $0x18] sm:$0xff]
    %v112 = vld [vmem:[%s3 + $0x20] sm:$0xff]
    %v113 = vld [vmem:[%s3 + $0x28] sm:$0xff]
    %v114 = vld [vmem:[%s3 + $0x30] sm:$0xff]
    %v115 = vld [vmem:[%s3 + $0x38] sm:$0xff]
    %v116 = vld [vmem:[%s4] sm:$0xff]
    %v117 = vld [vmem:[%s4 + $0x8] sm:$0xff]
    %v118 = vld [vmem:[%s4 + $0x10] sm:$0xff]
    %v119 = vld [vmem:[%s4 + $0x18] sm:$0xff]
    %v120 = vld [vmem:[%s4 + $0x20] sm:$0xff]
    %v121 = vld [vmem:[%s4 + $0x28] sm:$0xff]
    %v122 = vld [vmem:[%s4 + $0x30] sm:$0xff]
    %v123 = vld [vmem:[%s4 + $0x38] sm:$0xff]
    %125 = vset.pattern.permute.xlu0 0
    %126 = vperm.xlu0 %125, %v116
    %v127 = vpop.permute.xlu0 %126
    %130 = vset.pattern.permute.xlu0 0
    %131 = vperm.xlu0 %130, %v117
    %v132 = vpop.permute.xlu0 %131
    %135 = vset.pattern.permute.xlu0 0
    %136 = vperm.xlu0 %135, %v118
    %v137 = vpop.permute.xlu0 %136
    %140 = vset.pattern.permute.xlu0 0
    %141 = vperm.xlu0 %140, %v119
    %v142 = vpop.permute.xlu0 %141
    %145 = vset.pattern.permute.xlu0 0
    %146 = vperm.xlu0 %145, %v120
    %v147 = vpop.permute.xlu0 %146
    %150 = vset.pattern.permute.xlu0 0
    %151 = vperm.xlu0 %150, %v121
    %v152 = vpop.permute.xlu0 %151
    %155 = vset.pattern.permute.xlu0 0
    %156 = vperm.xlu0 %155, %v122
    %v157 = vpop.permute.xlu0 %156
    %160 = vset.pattern.permute.xlu0 0
    %161 = vperm.xlu0 %160, %v123
    %v162 = vpop.permute.xlu0 %161
    %vm164 = vcmask 261120
    %v166 = vsel %vm164, %v108, 0
    %v169 = vsel %vm164, %v109, 0
    %v172 = vsel %vm164, %v110, 0
    %v175 = vsel %vm164, %v111, 0
    %v178 = vsel %vm164, %v112, 0
    %v181 = vsel %vm164, %v113, 0
    %v184 = vsel %vm164, %v114, 0
    %v187 = vsel %vm164, %v115, 0
    %189 = vmatpush.msra.mxu0 0.0
    %190 = vmatpush.msra.mxu0 0.0
    %191 = vmatpush.msra.mxu0 0.0
    %192 = vmatpush.msra.mxu0 0.0
    %193 = vmatpush.msra.mxu0 0.0
    %194 = vmatpush.msra.mxu0 0.0
    %195 = vmatpush.msra.mxu0 0.0
    %196 = vmatpush.msra.mxu0 0.0
    %197 = vmatpush.msra.mxu0 0.0
    %198 = vmatpush.msra.mxu0 0.0
    %199 = vmatpush.msra.mxu0 0.0
    %200 = vmatpush.msra.mxu0 0.0
    %201 = vmatpush.msra.mxu0 %v107
    %202 = vmatpush.msra.mxu0 %v106
    %203 = vmatpush.msra.mxu0 %v105
    %204 = vmatpush.msra.mxu0 %v104
    %205 = vmatmul.f32.gmra.mxu0 %v166
    %v206 = vpop.f32.mrf.mxu0
    %v207 = vadd.f32 %v127, %v206
    %208 = vmatmul.f32.gmra.mxu0 %v169
    %v209 = vpop.f32.mrf.mxu0
    %v210 = vadd.f32 %v132, %v209
    %211 = vmatmul.f32.gmra.mxu0 %v172
    %v212 = vpop.f32.mrf.mxu0
    %v213 = vadd.f32 %v137, %v212
    %214 = vmatmul.f32.gmra.mxu0 %v175
    %v215 = vpop.f32.mrf.mxu0
    %v216 = vadd.f32 %v142, %v215
    %217 = vmatmul.f32.gmra.mxu0 %v178
    %v218 = vpop.f32.mrf.mxu0
    %v219 = vadd.f32 %v147, %v218
    %220 = vmatmul.f32.gmra.mxu0 %v181
    %v221 = vpop.f32.mrf.mxu0
    %v222 = vadd.f32 %v152, %v221
    %223 = vmatmul.f32.gmra.mxu0 %v184
    %v224 = vpop.f32.mrf.mxu0
    %v225 = vadd.f32 %v157, %v224
    %226 = vmatmul.f32.gmra.mxu0 %v187
    %v227 = vpop.f32.mrf.mxu0
    %v228 = vadd.f32 %v162, %v227
    %229 = vdwg.mxu0
    %v230 = vmax.f32 %v207, 0.0
    %v231 = vmax.f32 %v210, 0.0
    %v232 = vmax.f32 %v213, 0.0
    %v233 = vmax.f32 %v216, 0.0
    %v234 = vmax.f32 %v219, 0.0
    %v235 = vmax.f32 %v222, 0.0
    %v236 = vmax.f32 %v225, 0.0
    %v237 = vmax.f32 %v228, 0.0
    %v238 = vld [vmem:[%s5] sm:$0xff]
    %v239 = vld [vmem:[%s5 + $0x8] sm:$0xff]
    %v240 = vld [vmem:[%s5 + $0x10] sm:$0xff]
    %v241 = vld [vmem:[%s5 + $0x18] sm:$0xff]
    %v242 = vld [vmem:[%s5 + $0x20] sm:$0xff]
    %v243 = vld [vmem:[%s5 + $0x28] sm:$0xff]
    %v244 = vld [vmem:[%s5 + $0x30] sm:$0xff]
    %v245 = vld [vmem:[%s5 + $0x38] sm:$0xff]
    %247 = vset.pattern.permute.xlu0 0
    %248 = vperm.xlu0 %247, %v238
    %v249 = vpop.permute.xlu0 %248
    %252 = vset.pattern.permute.xlu0 0
    %253 = vperm.xlu0 %252, %v239
    %v254 = vpop.permute.xlu0 %253
    %257 = vset.pattern.permute.xlu0 0
    %258 = vperm.xlu0 %257, %v240
    %v259 = vpop.permute.xlu0 %258
    %262 = vset.pattern.permute.xlu0 0
    %263 = vperm.xlu0 %262, %v241
    %v264 = vpop.permute.xlu0 %263
    %267 = vset.pattern.permute.xlu0 0
    %268 = vperm.xlu0 %267, %v242
    %v269 = vpop.permute.xlu0 %268
    %272 = vset.pattern.permute.xlu0 0
    %273 = vperm.xlu0 %272, %v243
    %v274 = vpop.permute.xlu0 %273
    %277 = vset.pattern.permute.xlu0 0
    %278 = vperm.xlu0 %277, %v244
    %v279 = vpop.permute.xlu0 %278
    %282 = vset.pattern.permute.xlu0 0
    %283 = vperm.xlu0 %282, %v245
    %v284 = vpop.permute.xlu0 %283
    %v286 = vmul.f32 %v230, %v249
    %v287 = vmul.f32 %v231, %v254
    %v288 = vmul.f32 %v232, %v259
    %v289 = vmul.f32 %v233, %v264
    %v290 = vmul.f32 %v234, %v269
    %v291 = vmul.f32 %v235, %v274
    %v292 = vmul.f32 %v236, %v279
    %v293 = vmul.f32 %v237, %v284
    %v294 = vadd.f32 %v286, %v287
    %v295 = vadd.f32 %v294, %v288
    %v296 = vadd.f32 %v295, %v289
    %v297 = vadd.f32 %v296, %v290
    %v298 = vadd.f32 %v297, %v291
    %v299 = vadd.f32 %v298, %v292
    %v300 = vadd.f32 %v299, %v293
    %v301 = vrot.slane %v300, 4
    %v302 = vadd.f32 %v300, %v301
    %v303 = vrot.slane %v302, 2
    %v304 = vadd.f32 %v302, %v303
    %v305 = vrot.slane %v304, 1
    %v306 = vadd.f32 %v304, %v305
    %v307 = vld [vmem:[#allocation2] sm:$0x1]
    %309 = vset.pattern.permute.xlu0 0
    %310 = vperm.xlu0 %309, %v307
    %v311 = vpop.permute.xlu0 %310
    %v313 = vperm.slane %v311, 0
    %v314 = vadd.f32 %v306, %v313
    %315 = vst [vmem:[#allocation3] sm:$0x1] %v314
    // Predicated region
    $region30: #{tpu_custom_call.1} parent=1 // pred_check
      _
    $region31: #{tpu_custom_call.1} parent=1 // pred_check_branch
      %317 = sbr.rel (0) target = $region33
    $region32: #{tpu_custom_call.1} parent=1 // pred_region
      %319 = vsyncadd [#allocation4], 0
      %s321 = sshll.u32 [#allocation3], 4
      %s322 = int_to_ptr.vmem [resolvable:$true] %s321
      %s323 = sshll.u32 %s7, 4
      %s324 = int_to_ptr.hbm [resolvable:$true] %s323
      %326 = dma.vmem_to_hbm [thread:$0]  %s322, 16, %s324, [#allocation4]
    $region33: #{tpu_custom_call.1} parent=1 // pred_fallthru
      _
    // Predicated region
    $region34: #{tpu_custom_call.1} parent=1 // pred_check
      _
    $region35: #{tpu_custom_call.1} parent=1 // pred_check_branch
      %328 = sbr.rel (0) target = $region37
    $region36: #{tpu_custom_call.1} parent=1 // pred_region
      %330 = dma.done [#allocation4], 16
    $region37: #{tpu_custom_call.1} parent=1 // pred_fallthru
      _
    %331 = vsyncpa [#allocation4], 1

</llo_original>
